<compile_context>
chip_gen: v7x
topology: tpu7x:2x2x1
jax: 0.10.0
libtpu: 0.0.40
codegen_flags: <defaults>
</compile_context>

<pallas_src>
import jax
import jax.numpy as jnp
from jax import lax
from jax.experimental import pallas as pl
from jax.experimental.pallas import tpu as pltpu


# -----------------------------------------------------------------------------
# Kernel
# -----------------------------------------------------------------------------
def mlp_kernel(x_ref, w0_ref, b0_ref, wh_ref, bh_ref, wl_ref, bl_ref, o_ref):
    """One batch tile, batch on lanes.

    x_ref : (1, Bb)    f32       input, transposed (lane-dense)
    w0_ref: (H, 1)     f32       first Linear weight (PyTorch (out, in))
    b0_ref: (H, 1)     f32       first Linear bias
    wh_ref: (L-1,H,H)  bf16      hidden Linear weights, stacked
    bh_ref: (L-1,H,1)  f32/bf16  hidden Linear biases (dtype = epilogue dtype)
    wl_ref: (H, 1)     f32       last Linear weight, stored transposed (in, out)
    bl_ref: (1,)       f32       last Linear bias, SMEM scalar
    o_ref : (1, Bb)    f32       output, transposed (lane-dense)
    """
    act_dtype = bh_ref.dtype          # f32 (v5e-safe) or bf16 (v6e/v7x epilogue)
    w_dtype = wh_ref.dtype

    xt = x_ref[...]                                               # (1, Bb)

    # Layer 0: Linear(1, H).  K == 1 -> pure VPU broadcast multiply, no MXU.
    h = jnp.tanh((w0_ref[...] * xt + b0_ref[...]).astype(act_dtype))  # (H, Bb)

    # Hidden layers: Linear(H, H) on the MXU (bf16 operands, f32 accumulate);
    # bias add + tanh run in act_dtype (bf16 on v6e/v7x, f32 on v5e).
    n_hidden = wh_ref.shape[0]

    def body(i, h):
        z = jnp.dot(wh_ref[i], h.astype(w_dtype),
                    preferred_element_type=jnp.float32)           # (H, Bb) f32
        return jnp.tanh(z.astype(act_dtype) + bh_ref[i])

    h = lax.fori_loop(0, n_hidden, body, h, unroll=(n_hidden <= 8))

    # Last layer: Linear(H, 1).  N == 1 -> elementwise multiply + sublane (XLU)
    # reduction instead of a degenerate MXU pass.  Padded batch lanes produce
    # garbage that the wrapper slices off; no in-kernel batch reduction exists.
    out = jnp.sum(wl_ref[...] * h.astype(jnp.float32), axis=0, keepdims=True)
    o_ref[...] = (out + bl_ref[0]).astype(o_ref.dtype)            # lane-dense store


# -----------------------------------------------------------------------------
# Parameters (PyTorch nn.Linear-style init, (out, in) weight layout)
# -----------------------------------------------------------------------------
def make_params(key, num_layers, num_hidden, dtype=jnp.float32):
    dims = [1] + [num_hidden] * num_layers + [1]
    params = []
    for i in range(len(dims) - 1):
        fan_in, fan_out = dims[i], dims[i + 1]
        key, kw, kb = jax.random.split(key, 3)
        bound = 1.0 / (fan_in ** 0.5)
        w = jax.random.uniform(kw, (fan_out, fan_in), dtype, -bound, bound)
        b = jax.random.uniform(kb, (fan_out,), dtype, -bound, bound)
        params.append((w, b))
    return params


def _default_act_dtype():
    """bf16 bias+tanh epilogue on bf16-capable VPU/EUP chips, f32 otherwise."""
    try:
        kind = jax.devices()[0].device_kind.lower()
    except Exception:
        return jnp.float32
    if any(tag in kind for tag in ("v6", "v7", "tpu7")):
        return jnp.bfloat16
    return jnp.float32


def pack_params(params, hidden_dtype=jnp.bfloat16, act_dtype=None):
    """Pack the per-layer (W, b) list into 7 fixed kernel operands."""
    if act_dtype is None:
        act_dtype = _default_act_dtype()
    n_linear = len(params)
    assert n_linear >= 3, "packed kernel expects num_layers >= 2"
    w0, b0 = params[0]                         # (H, 1), (H,)
    wl, bl = params[-1]                        # (1, H), (1,)
    H = w0.shape[0]
    n_hidden = n_linear - 2
    wh = jnp.stack([params[1 + i][0] for i in range(n_hidden)]).astype(hidden_dtype)
    bh = jnp.stack([params[1 + i][1] for i in range(n_hidden)]).reshape(n_hidden, H, 1)
    return (
        w0.reshape(H, 1).astype(jnp.float32),
        b0.reshape(H, 1).astype(jnp.float32),
        wh,                                    # (L-1, H, H) bf16
        bh.astype(act_dtype),                  # (L-1, H, 1) epilogue dtype
        wl.reshape(H, 1).astype(jnp.float32),  # stored transposed: feature on sublanes
        jnp.asarray(bl, jnp.float32).reshape(1,),   # SMEM scalar
    )


# -----------------------------------------------------------------------------
# Wrapper
# -----------------------------------------------------------------------------
def _pallas_forward(xt, w0, b0, wh, bh, wl, bl, *, bb, single_buffer_weights):
    b_padded = xt.shape[1]
    H = w0.shape[0]
    n_hidden = wh.shape[0]

    def resident(a):
        # Full-array block, same block for every grid step (weights stay in VMEM).
        idx = lambda i, _n=a.ndim: (0,) * _n
        if single_buffer_weights:
            return pl.BlockSpec(a.shape, idx, pipeline_mode=pl.Buffered(1))
        return pl.BlockSpec(a.shape, idx)

    # VMEM budget: x/out tiles (double-buffered) + resident weights + activations.
    weight_bytes = sum(int(a.size) * a.dtype.itemsize for a in (w0, b0, wh, bh, wl))
    act_bytes = H * bb * (4 + bh.dtype.itemsize) * 2
    weight_bufs = 1 if single_buffer_weights else 2
    vmem_need = 4 * bb * 4 + weight_bufs * weight_bytes + act_bytes
    vmem_limit = int(min(max(vmem_need + (4 << 20), 8 << 20), 32 << 20))

    flops = 2 * b_padded * H * H * n_hidden + 4 * b_padded * H
    transcendentals = b_padded * H * (n_hidden + 1)
    bytes_accessed = (
        sum(int(a.size) * a.dtype.itemsize for a in (xt, w0, b0, wh, bh, wl, bl))
        + b_padded * xt.dtype.itemsize
    )

    return pl.pallas_call(
        mlp_kernel,
        out_shape=jax.ShapeDtypeStruct((1, b_padded), xt.dtype),
        grid=(b_padded // bb,),
        in_specs=[
            pl.BlockSpec((1, bb), lambda i: (0, i)),             # x tile, batch on lanes
            resident(w0), resident(b0),
            resident(wh), resident(bh),
            resident(wl),
            pl.BlockSpec(memory_space=pltpu.MemorySpace.SMEM),   # bl scalar in SMEM
        ],
        out_specs=pl.BlockSpec((1, bb), lambda i: (0, i)),
        compiler_params=pltpu.CompilerParams(
            dimension_semantics=("parallel",),                   # megacore split on v7x
            vmem_limit_bytes=vmem_limit,
        ),
        cost_estimate=pl.CostEstimate(
            flops=flops,
            transcendentals=transcendentals,
            bytes_accessed=bytes_accessed,
        ),
    )(xt, w0, b0, wh, bh, wl, bl)


def simple_mlp(x, packed, *, block_b=4096):
    """x: (B, 1) f32 -> (B, 1) f32."""
    w0, b0, wh, bh, wl, bl = packed
    B = x.shape[0]
    lane = 128

    # Batch on lanes, rounded up to whole vregs.
    b_lanes = pl.cdiv(B, lane) * lane
    # Tile grows with B up to block_b (multiple of 128 lanes) ...
    bb = min(pl.cdiv(block_b, lane) * lane, b_lanes)
    # ... but keep >= 2 grid steps whenever there are >= 2 lane groups so the
    # "parallel" batch axis can be sharded across v7x's two TensorCores.
    if b_lanes >= 2 * lane:
        bb = min(bb, max(lane, (b_lanes // 2 // lane) * lane))
    b_padded = pl.cdiv(b_lanes, bb) * bb

    xt = jnp.zeros((1, b_padded), x.dtype).at[0, :B].set(x[:, 0])

    try:
        # Resident weights single-buffered (constant index_map needs no double
        # buffer); fall back to default buffering if this JAX/Mosaic build
        # rejects pl.Buffered(1) for the main pipeline.
        out_t = _pallas_forward(xt, w0, b0, wh, bh, wl, bl,
                                bb=bb, single_buffer_weights=True)
    except Exception:
        out_t = _pallas_forward(xt, w0, b0, wh, bh, wl, bl,
                                bb=bb, single_buffer_weights=False)

    return out_t[0, :B].reshape(B, 1)


# -----------------------------------------------------------------------------
# Plain-JAX reference (f32 everywhere)
# -----------------------------------------------------------------------------
def reference_mlp(x, params):
    h = x
    n = len(params)
    for i, (w, b) in enumerate(params):
        h = h @ w.T + b
        if i < n - 1:
            h = jnp.tanh(h)
    return h


if __name__ == "__main__":
    num_layers = 2     # Linear(1,H), Tanh, Linear(H,H), Tanh, Linear(H,1)
    num_hidden = 32
    batch = 200        # not a multiple of 128: exercises padding + a 2-step grid

    key = jax.random.PRNGKey(0)
    key, kx = jax.random.split(key)
    x = jax.random.normal(kx, (batch, 1), jnp.float32)
    params = make_params(key, num_layers, num_hidden)
    packed = pack_params(params)   # bf16 hidden weights; epilogue dtype per chip

    out = jax.block_until_ready(simple_mlp(x, packed))
    ref = reference_mlp(x, params)

    assert out.shape == (batch, 1)
    # Hidden matmuls use bf16 operands (f32 accumulation) and the bias+tanh
    # epilogue may run in bf16 on v6e/v7x, against an all-f32 reference;
    # observed error is ~1e-3..5e-3.
    assert jnp.allclose(out, ref, atol=2e-2, rtol=2e-2), "mismatch vs reference"

    print("KERNEL_OK")
</pallas_src>

<mosaic_0001>
module attributes {stable_mosaic.version = 11 : i64} {
  func.func @mlp_kernel(%arg0: i32, %arg1: memref<1x128xf32, #tpu.memory_space<vmem>>, %arg2: memref<32x1xf32, #tpu.memory_space<vmem>>, %arg3: memref<32x1xf32, #tpu.memory_space<vmem>>, %arg4: memref<1x32x32xbf16, #tpu.memory_space<vmem>>, %arg5: memref<1x32x1xf32, #tpu.memory_space<vmem>>, %arg6: memref<32x1xf32, #tpu.memory_space<vmem>>, %arg7: memref<1xf32, #tpu.memory_space<smem>>, %arg8: memref<1x128xf32, #tpu.memory_space<vmem>>) attributes {dimension_semantics = [#tpu.dimension_semantics<parallel>], iteration_bounds = array<i64: 2>, scalar_prefetch = 0 : i64, scratch_operands = 0 : i64, tpu.core_type = #tpu.core_type<tc>, window_params = [{transform_indices = @transform_0, window_bounds = array<i64: 1, 128>}, {pipeline_mode = #tpu.pipeline_mode<synchronous>, transform_indices = @transform_1, window_bounds = array<i64: 32, 1>}, {pipeline_mode = #tpu.pipeline_mode<synchronous>, transform_indices = @transform_2, window_bounds = array<i64: 32, 1>}, {pipeline_mode = #tpu.pipeline_mode<synchronous>, transform_indices = @transform_3, window_bounds = array<i64: 1, 32, 32>}, {pipeline_mode = #tpu.pipeline_mode<synchronous>, transform_indices = @transform_4, window_bounds = array<i64: 1, 32, 1>}, {pipeline_mode = #tpu.pipeline_mode<synchronous>, transform_indices = @transform_5, window_bounds = array<i64: 32, 1>}, {transform_indices = @transform_6, window_bounds = array<i64: 1>}, {transform_indices = @transform_7, window_bounds = array<i64: 1, 128>}]} {
    %c0 = arith.constant 0 : index
    %c0_0 = arith.constant 0 : index
    %0 = vector.load %arg1[%c0, %c0_0] : memref<1x128xf32, #tpu.memory_space<vmem>>, vector<1x128xf32>
    %c0_1 = arith.constant 0 : index
    %c0_2 = arith.constant 0 : index
    %1 = vector.load %arg2[%c0_1, %c0_2] : memref<32x1xf32, #tpu.memory_space<vmem>>, vector<32x1xf32>
    %2 = vector.broadcast %1 : vector<32x1xf32> to vector<32x128xf32>
    %3 = vector.broadcast %0 : vector<1x128xf32> to vector<32x128xf32>
    %4 = arith.mulf %2, %3 : vector<32x128xf32>
    %c0_3 = arith.constant 0 : index
    %c0_4 = arith.constant 0 : index
    %5 = vector.load %arg3[%c0_3, %c0_4] : memref<32x1xf32, #tpu.memory_space<vmem>>, vector<32x1xf32>
    %6 = vector.broadcast %5 : vector<32x1xf32> to vector<32x128xf32>
    %7 = arith.addf %4, %6 : vector<32x128xf32>
    %8 = math.tanh %7 : vector<32x128xf32>
    %c0_i32 = arith.constant 0 : i32
    %9 = arith.index_cast %c0_i32 : i32 to index
    %c0_5 = arith.constant 0 : index
    %c0_6 = arith.constant 0 : index
    %10 = vector.load %arg4[%9, %c0_5, %c0_6] : memref<1x32x32xbf16, #tpu.memory_space<vmem>>, vector<1x32x32xbf16>
    %11 = vector.shape_cast %10 : vector<1x32x32xbf16> to vector<32x32xbf16>
    %12 = arith.truncf %8 : vector<32x128xf32> to vector<32x128xbf16>
    %cst = arith.constant dense<0.000000e+00> : vector<32x128xf32>
    %13 = tpu.matmul %11, %12, %cst {dimension_numbers = #tpu.dot_dimension_numbers<[1], [0], [0], [1], [0, 0, 1, 1], [], []>} : vector<32x32xbf16>, vector<32x128xbf16>, vector<32x128xf32> -> vector<32x128xf32>
    %14 = arith.index_cast %c0_i32 : i32 to index
    %c0_7 = arith.constant 0 : index
    %c0_8 = arith.constant 0 : index
    %15 = vector.load %arg5[%14, %c0_7, %c0_8] : memref<1x32x1xf32, #tpu.memory_space<vmem>>, vector<1x32x1xf32>
    %16 = vector.shape_cast %15 : vector<1x32x1xf32> to vector<32x1xf32>
    %17 = vector.broadcast %16 : vector<32x1xf32> to vector<32x128xf32>
    %18 = arith.addf %13, %17 : vector<32x128xf32>
    %19 = math.tanh %18 : vector<32x128xf32>
    %c1_i32 = arith.constant 1 : i32
    %c0_9 = arith.constant 0 : index
    %c0_10 = arith.constant 0 : index
    %20 = vector.load %arg6[%c0_9, %c0_10] : memref<32x1xf32, #tpu.memory_space<vmem>>, vector<32x1xf32>
    %21 = vector.broadcast %20 : vector<32x1xf32> to vector<32x128xf32>
    %22 = arith.mulf %21, %19 : vector<32x128xf32>
    %cst_11 = arith.constant dense<0.000000e+00> : vector<128xf32>
    %23 = vector.multi_reduction <add>, %22, %cst_11 [0] : vector<32x128xf32> to vector<128xf32>
    %24 = vector.shape_cast %23 : vector<128xf32> to vector<1x128xf32>
    %c0_12 = arith.constant 0 : index
    %25 = memref.load %arg7[%c0_12] : memref<1xf32, #tpu.memory_space<smem>>
    %26 = vector.broadcast %25 : f32 to vector<1x128xf32>
    %27 = arith.addf %24, %26 : vector<1x128xf32>
    %c0_13 = arith.constant 0 : index
    %c0_14 = arith.constant 0 : index
    %28 = vector.load %arg8[%c0_13, %c0_14] : memref<1x128xf32, #tpu.memory_space<vmem>>, vector<1x128xf32>
    tpu.vector_store %arg8[%c0_13, %c0_14], %27 {strides = array<i32>} : memref<1x128xf32, #tpu.memory_space<vmem>>, vector<1x128xf32>,
    return
  }
  func.func @transform_0(%arg0: i32) -> (i32, i32) {
    %c0_i32 = arith.constant 0 : i32
    %c0_i32_0 = arith.constant 0 : i32
    return %c0_i32, %arg0 : i32, i32
  }
  func.func @transform_1(%arg0: i32) -> (i32, i32) {
    %c0_i32 = arith.constant 0 : i32
    %c0_i32_0 = arith.constant 0 : i32
    %c0_i32_1 = arith.constant 0 : i32
    return %c0_i32, %c0_i32_0 : i32, i32
  }
  func.func @transform_2(%arg0: i32) -> (i32, i32) {
    %c0_i32 = arith.constant 0 : i32
    %c0_i32_0 = arith.constant 0 : i32
    %c0_i32_1 = arith.constant 0 : i32
    return %c0_i32, %c0_i32_0 : i32, i32
  }
  func.func @transform_3(%arg0: i32) -> (i32, i32, i32) {
    %c0_i32 = arith.constant 0 : i32
    %c0_i32_0 = arith.constant 0 : i32
    %c0_i32_1 = arith.constant 0 : i32
    %c0_i32_2 = arith.constant 0 : i32
    return %c0_i32, %c0_i32_0, %c0_i32_1 : i32, i32, i32
  }
  func.func @transform_4(%arg0: i32) -> (i32, i32, i32) {
    %c0_i32 = arith.constant 0 : i32
    %c0_i32_0 = arith.constant 0 : i32
    %c0_i32_1 = arith.constant 0 : i32
    %c0_i32_2 = arith.constant 0 : i32
    return %c0_i32, %c0_i32_0, %c0_i32_1 : i32, i32, i32
  }
  func.func @transform_5(%arg0: i32) -> (i32, i32) {
    %c0_i32 = arith.constant 0 : i32
    %c0_i32_0 = arith.constant 0 : i32
    %c0_i32_1 = arith.constant 0 : i32
    return %c0_i32, %c0_i32_0 : i32, i32
  }
  func.func @transform_6(%arg0: i32) -> i32 {
    %c0_i32 = arith.constant 0 : i32
    %c0_i32_0 = arith.constant 0 : i32
    return %c0_i32 : i32
  }
  func.func @transform_7(%arg0: i32) -> (i32, i32) {
    %c0_i32 = arith.constant 0 : i32
    %c0_i32_0 = arith.constant 0 : i32
    return %c0_i32, %arg0 : i32, i32
  }
}

module attributes {stable_mosaic.version = 11 : i64} {
  func.func @mlp_kernel(%arg0: i32, %arg1: memref<1x128xf32, #tpu.memory_space<vmem>>, %arg2: memref<32x1xf32, #tpu.memory_space<vmem>>, %arg3: memref<32x1xf32, #tpu.memory_space<vmem>>, %arg4: memref<1x32x32xbf16, #tpu.memory_space<vmem>>, %arg5: memref<1x32x1xf32, #tpu.memory_space<vmem>>, %arg6: memref<32x1xf32, #tpu.memory_space<vmem>>, %arg7: memref<1xf32, #tpu.memory_space<smem>>, %arg8: memref<1x128xf32, #tpu.memory_space<vmem>>) attributes {dimension_semantics = [#tpu.dimension_semantics<parallel>], iteration_bounds = array<i64: 2>, scalar_prefetch = 0 : i64, scratch_operands = 0 : i64, tpu.core_type = #tpu.core_type<tc>, window_params = [{transform_indices = @transform_0, window_bounds = array<i64: 1, 128>}, {pipeline_mode = #tpu.pipeline_mode<synchronous>, transform_indices = @transform_1, window_bounds = array<i64: 32, 1>}, {pipeline_mode = #tpu.pipeline_mode<synchronous>, transform_indices = @transform_2, window_bounds = array<i64: 32, 1>}, {pipeline_mode = #tpu.pipeline_mode<synchronous>, transform_indices = @transform_3, window_bounds = array<i64: 1, 32, 32>}, {pipeline_mode = #tpu.pipeline_mode<synchronous>, transform_indices = @transform_4, window_bounds = array<i64: 1, 32, 1>}, {pipeline_mode = #tpu.pipeline_mode<synchronous>, transform_indices = @transform_5, window_bounds = array<i64: 32, 1>}, {transform_indices = @transform_6, window_bounds = array<i64: 1>}, {transform_indices = @transform_7, window_bounds = array<i64: 1, 128>}]} {
    %c0 = arith.constant 0 : index
    %c0_0 = arith.constant 0 : index
    %0 = vector.load %arg1[%c0, %c0_0] : memref<1x128xf32, #tpu.memory_space<vmem>>, vector<1x128xf32>
    %c0_1 = arith.constant 0 : index
    %c0_2 = arith.constant 0 : index
    %1 = vector.load %arg2[%c0_1, %c0_2] : memref<32x1xf32, #tpu.memory_space<vmem>>, vector<32x1xf32>
    %2 = vector.broadcast %1 : vector<32x1xf32> to vector<32x128xf32>
    %3 = vector.broadcast %0 : vector<1x128xf32> to vector<32x128xf32>
    %4 = arith.mulf %2, %3 : vector<32x128xf32>
    %c0_3 = arith.constant 0 : index
    %c0_4 = arith.constant 0 : index
    %5 = vector.load %arg3[%c0_3, %c0_4] : memref<32x1xf32, #tpu.memory_space<vmem>>, vector<32x1xf32>
    %6 = vector.broadcast %5 : vector<32x1xf32> to vector<32x128xf32>
    %7 = arith.addf %4, %6 : vector<32x128xf32>
    %8 = math.tanh %7 : vector<32x128xf32>
    %c0_i32 = arith.constant 0 : i32
    %9 = arith.index_cast %c0_i32 : i32 to index
    %c0_5 = arith.constant 0 : index
    %c0_6 = arith.constant 0 : index
    %10 = vector.load %arg4[%9, %c0_5, %c0_6] : memref<1x32x32xbf16, #tpu.memory_space<vmem>>, vector<1x32x32xbf16>
    %11 = vector.shape_cast %10 : vector<1x32x32xbf16> to vector<32x32xbf16>
    %12 = arith.truncf %8 : vector<32x128xf32> to vector<32x128xbf16>
    %cst = arith.constant dense<0.000000e+00> : vector<32x128xf32>
    %13 = tpu.matmul %11, %12, %cst {dimension_numbers = #tpu.dot_dimension_numbers<[1], [0], [0], [1], [0, 0, 1, 1], [], []>} : vector<32x32xbf16>, vector<32x128xbf16>, vector<32x128xf32> -> vector<32x128xf32>
    %14 = arith.index_cast %c0_i32 : i32 to index
    %c0_7 = arith.constant 0 : index
    %c0_8 = arith.constant 0 : index
    %15 = vector.load %arg5[%14, %c0_7, %c0_8] : memref<1x32x1xf32, #tpu.memory_space<vmem>>, vector<1x32x1xf32>
    %16 = vector.shape_cast %15 : vector<1x32x1xf32> to vector<32x1xf32>
    %17 = vector.broadcast %16 : vector<32x1xf32> to vector<32x128xf32>
    %18 = arith.addf %13, %17 : vector<32x128xf32>
    %19 = math.tanh %18 : vector<32x128xf32>
    %c1_i32 = arith.constant 1 : i32
    %c0_9 = arith.constant 0 : index
    %c0_10 = arith.constant 0 : index
    %20 = vector.load %arg6[%c0_9, %c0_10] : memref<32x1xf32, #tpu.memory_space<vmem>>, vector<32x1xf32>
    %21 = vector.broadcast %20 : vector<32x1xf32> to vector<32x128xf32>
    %22 = arith.mulf %21, %19 : vector<32x128xf32>
    %cst_11 = arith.constant dense<0.000000e+00> : vector<128xf32>
    %23 = vector.multi_reduction <add>, %22, %cst_11 [0] : vector<32x128xf32> to vector<128xf32>
    %24 = vector.shape_cast %23 : vector<128xf32> to vector<1x128xf32>
    %c0_12 = arith.constant 0 : index
    %25 = memref.load %arg7[%c0_12] : memref<1xf32, #tpu.memory_space<smem>>
    %26 = vector.broadcast %25 : f32 to vector<1x128xf32>
    %27 = arith.addf %24, %26 : vector<1x128xf32>
    %c0_13 = arith.constant 0 : index
    %c0_14 = arith.constant 0 : index
    %28 = vector.load %arg8[%c0_13, %c0_14] : memref<1x128xf32, #tpu.memory_space<vmem>>, vector<1x128xf32>
    tpu.vector_store %arg8[%c0_13, %c0_14], %27 {strides = array<i32>} : memref<1x128xf32, #tpu.memory_space<vmem>>, vector<1x128xf32>,
    return
  }
  func.func @transform_0(%arg0: i32) -> (i32, i32) {
    %c0_i32 = arith.constant 0 : i32
    %c0_i32_0 = arith.constant 0 : i32
    return %c0_i32, %arg0 : i32, i32
  }
  func.func @transform_1(%arg0: i32) -> (i32, i32) {
    %c0_i32 = arith.constant 0 : i32
    %c0_i32_0 = arith.constant 0 : i32
    %c0_i32_1 = arith.constant 0 : i32
    return %c0_i32, %c0_i32_0 : i32, i32
  }
  func.func @transform_2(%arg0: i32) -> (i32, i32) {
    %c0_i32 = arith.constant 0 : i32
    %c0_i32_0 = arith.constant 0 : i32
    %c0_i32_1 = arith.constant 0 : i32
    return %c0_i32, %c0_i32_0 : i32, i32
  }
  func.func @transform_3(%arg0: i32) -> (i32, i32, i32) {
    %c0_i32 = arith.constant 0 : i32
    %c0_i32_0 = arith.constant 0 : i32
    %c0_i32_1 = arith.constant 0 : i32
    %c0_i32_2 = arith.constant 0 : i32
    return %c0_i32, %c0_i32_0, %c0_i32_1 : i32, i32, i32
  }
  func.func @transform_4(%arg0: i32) -> (i32, i32, i32) {
    %c0_i32 = arith.constant 0 : i32
    %c0_i32_0 = arith.constant 0 : i32
    %c0_i32_1 = arith.constant 0 : i32
    %c0_i32_2 = arith.constant 0 : i32
    return %c0_i32, %c0_i32_0, %c0_i32_1 : i32, i32, i32
  }
  func.func @transform_5(%arg0: i32) -> (i32, i32) {
    %c0_i32 = arith.constant 0 : i32
    %c0_i32_0 = arith.constant 0 : i32
    %c0_i32_1 = arith.constant 0 : i32
    return %c0_i32, %c0_i32_0 : i32, i32
  }
  func.func @transform_6(%arg0: i32) -> i32 {
    %c0_i32 = arith.constant 0 : i32
    %c0_i32_0 = arith.constant 0 : i32
    return %c0_i32 : i32
  }
  func.func @transform_7(%arg0: i32) -> (i32, i32) {
    %c0_i32 = arith.constant 0 : i32
    %c0_i32_0 = arith.constant 0 : i32
    return %c0_i32, %arg0 : i32, i32
  }
}

</mosaic_0001>

<llo_original>
// kernel: tpu_custom_call.1
$region0: #{tpu_custom_call.1}
  #allocation0 [shape = 'u32[]', space=smem, size = 0x4, offset = 0x4, fixed_abs, tag = 'smem constant byte address 0x4 - core index']
  #allocation1 [shape = 'u32[144,128]{1,0:T(1,128)}', space=vmem, size = 0x12000, scoped, tag = 'internal scratch']
  #allocation2 [shape = 'f32[1]{0:T(128)S(6)}', space=smem, size = 0x200, scoped, tag = 'scoped memory for tpu_custom_call.1']
  %s0 = inlined_call_operand.vmem [shape: f32[1,256], index: 0, kind: input, shape index: {}]
  %s1 = inlined_call_operand.vmem [shape: f32[32,1], index: 1, kind: input, shape index: {}]
  %s2 = inlined_call_operand.vmem [shape: f32[32,1], index: 2, kind: input, shape index: {}]
  %s3 = inlined_call_operand.vmem [shape: bf16[1,32,32], index: 3, kind: input, shape index: {}]
  %s4 = inlined_call_operand.vmem [shape: f32[1,32,1], index: 4, kind: input, shape index: {}]
  %s5 = inlined_call_operand.vmem [shape: f32[32,1], index: 5, kind: input, shape index: {}]
  %s6 = inlined_call_operand.<no memory space> [shape: f32[1], index: 6, kind: input, shape index: {}]
  %s7 = inlined_call_operand.hbm [shape: f32[1,256], index: 7, kind: output, shape index: {}]
  %s8 = sld [smem:[#allocation0]]
  $region61: #{tpu_custom_call.1} parent=0
    _
  %s10 = ssub.s32 1, %s8
  %s11 = scalar_select 0, %s10, %s8
  %12 = sst [smem:[#allocation2]] %s6
  $region1: #{tpu_custom_call.1} parent=0
    #allocation3 [shape = 'u8[1024]{0}', space=vmem, size = 0x400, scoped, tag = 'output window, operand 0']
    #allocation4 [shape = 's32[2]{0}', space=sflag, size = 0x8, scoped, tag = 'scoped memory for tpu_custom_call.1']
    %13 = vsyncpa [#allocation4], 0
    %s14 = scalar_lea.sflag [#allocation4], 1
    %15 = vsyncpa %s14, 0
    loop: start=0, step=1, limit=4
    $region2: #{tpu_custom_call.1} parent=1 // loop_pre_header
      _
    $region3: #{tpu_custom_call.1} parent=1 // loop_header
      %s17 = sphi 0, %s21
      %p18 = scmp.ge.s32.totalorder %s17, 4
      %s27 = sphi 0, %s29
      %s30 = sphi 0, %s27
      %s31 = sphi 0, %s30
      %s47 = sphi 0, %s31
      %s51 = sphi 0, %s51
      %s53 = sphi 0, %s51
      %s54 = sphi 0, %s53
      %s68 = sphi 0, %s54
      %s72 = sphi 0, %s72
      %s74 = sphi 0, %s72
      %s75 = sphi 0, %s74
      %s89 = sphi 0, %s75
      %s93 = sphi 0, %s93
      %s95 = sphi 0, %s93
      %s96 = sphi 0, %s95
      %s110 = sphi 0, %s96
      %s114 = sphi 0, %s114
      %s116 = sphi 0, %s114
      %s117 = sphi 0, %s116
      %s131 = sphi 0, %s117
      %s135 = sphi 0, %s135
      %s137 = sphi 0, %s135
      %s138 = sphi 0, %s137
      %s152 = sphi 0, %s138
      %s156 = sphi 0, %s156
      %s158 = sphi 0, %s156
      %s159 = sphi 0, %s158
      %s173 = sphi 0, %s159
      %s179 = sphi 0, %s181
      %s182 = sphi 0, %s179
      %s183 = sphi 0, %s182
      %s199 = sphi 0, %s183
    $region4: #{tpu_custom_call.1} parent=1 // loop_header_branch
      %20 = sbr.rel (%p18) target = $region8
    $region5: #{tpu_custom_call.1} parent=1 // loop_body
      %s22 = ssub.s32 %s17, 1
      %s23 = ssub.s32 %s17, 2
      %s24 = sadd.s32 %s17, 1
      %s25 = ssub.s32 %s17, %s24
      %p26 = scmp.eq.s32.totalorder %s25, 0
      %s28 = sadd.s32 %s27, 1
      %s29 = scalar_select %p26, %s27, %s28
      %p32 = pneg %p26
      %p33 = scmp.eq.s32.totalorder %s17, 1
      %p34 = por %p32, %p33
      %p35 = scmp.ne.s32.totalorder %s27, %s30
      %p36 = scmp.eq.s32.totalorder %s17, 0
      %p37 = por %p35, %p36
      %p38 = scmp.ne.s32.totalorder %s27, %s30
      %p39 = scmp.eq.s32.totalorder %s22, 1
      %p40 = por %p38, %p39
      %p41 = scmp.ne.s32.totalorder %s30, %s31
      %p42 = scmp.eq.s32.totalorder %s22, 0
      %p43 = por %p41, %p42
      %p44 = scmp.ne.s32.totalorder %s30, %s31
      %p45 = scmp.eq.s32.totalorder %s23, 1
      %p46 = por %p44, %p45
      %p48 = scmp.ne.s32.totalorder %s31, %s47
      %p49 = scmp.eq.s32.totalorder %s23, 0
      %p50 = por %p48, %p49
      %s52 = sadd.s32 %s51, 1
      %p55 = scmp.eq.s32.totalorder %s17, 1
      %p56 = scmp.ne.s32.totalorder %s51, %s53
      %p57 = scmp.eq.s32.totalorder %s17, 0
      %p58 = por %p56, %p57
      %p59 = scmp.ne.s32.totalorder %s51, %s53
      %p60 = scmp.eq.s32.totalorder %s22, 1
      %p61 = por %p59, %p60
      %p62 = scmp.ne.s32.totalorder %s53, %s54
      %p63 = scmp.eq.s32.totalorder %s22, 0
      %p64 = por %p62, %p63
      %p65 = scmp.ne.s32.totalorder %s53, %s54
      %p66 = scmp.eq.s32.totalorder %s23, 1
      %p67 = por %p65, %p66
      %p69 = scmp.ne.s32.totalorder %s54, %s68
      %p70 = scmp.eq.s32.totalorder %s23, 0
      %p71 = por %p69, %p70
      %s73 = sadd.s32 %s72, 1
      %p76 = scmp.eq.s32.totalorder %s17, 1
      %p77 = scmp.ne.s32.totalorder %s72, %s74
      %p78 = scmp.eq.s32.totalorder %s17, 0
      %p79 = por %p77, %p78
      %p80 = scmp.ne.s32.totalorder %s72, %s74
      %p81 = scmp.eq.s32.totalorder %s22, 1
      %p82 = por %p80, %p81
      %p83 = scmp.ne.s32.totalorder %s74, %s75
      %p84 = scmp.eq.s32.totalorder %s22, 0
      %p85 = por %p83, %p84
      %p86 = scmp.ne.s32.totalorder %s74, %s75
      %p87 = scmp.eq.s32.totalorder %s23, 1
      %p88 = por %p86, %p87
      %p90 = scmp.ne.s32.totalorder %s75, %s89
      %p91 = scmp.eq.s32.totalorder %s23, 0
      %p92 = por %p90, %p91
      %s94 = sadd.s32 %s93, 1
      %p97 = scmp.eq.s32.totalorder %s17, 1
      %p98 = scmp.ne.s32.totalorder %s93, %s95
      %p99 = scmp.eq.s32.totalorder %s17, 0
      %p100 = por %p98, %p99
      %p101 = scmp.ne.s32.totalorder %s93, %s95
      %p102 = scmp.eq.s32.totalorder %s22, 1
      %p103 = por %p101, %p102
      %p104 = scmp.ne.s32.totalorder %s95, %s96
      %p105 = scmp.eq.s32.totalorder %s22, 0
      %p106 = por %p104, %p105
      %p107 = scmp.ne.s32.totalorder %s95, %s96
      %p108 = scmp.eq.s32.totalorder %s23, 1
      %p109 = por %p107, %p108
      %p111 = scmp.ne.s32.totalorder %s96, %s110
      %p112 = scmp.eq.s32.totalorder %s23, 0
      %p113 = por %p111, %p112
      %s115 = sadd.s32 %s114, 1
      %p118 = scmp.eq.s32.totalorder %s17, 1
      %p119 = scmp.ne.s32.totalorder %s114, %s116
      %p120 = scmp.eq.s32.totalorder %s17, 0
      %p121 = por %p119, %p120
      %p122 = scmp.ne.s32.totalorder %s114, %s116
      %p123 = scmp.eq.s32.totalorder %s22, 1
      %p124 = por %p122, %p123
      %p125 = scmp.ne.s32.totalorder %s116, %s117
      %p126 = scmp.eq.s32.totalorder %s22, 0
      %p127 = por %p125, %p126
      %p128 = scmp.ne.s32.totalorder %s116, %s117
      %p129 = scmp.eq.s32.totalorder %s23, 1
      %p130 = por %p128, %p129
      %p132 = scmp.ne.s32.totalorder %s117, %s131
      %p133 = scmp.eq.s32.totalorder %s23, 0
      %p134 = por %p132, %p133
      %s136 = sadd.s32 %s135, 1
      %p139 = scmp.eq.s32.totalorder %s17, 1
      %p140 = scmp.ne.s32.totalorder %s135, %s137
      %p141 = scmp.eq.s32.totalorder %s17, 0
      %p142 = por %p140, %p141
      %p143 = scmp.ne.s32.totalorder %s135, %s137
      %p144 = scmp.eq.s32.totalorder %s22, 1
      %p145 = por %p143, %p144
      %p146 = scmp.ne.s32.totalorder %s137, %s138
      %p147 = scmp.eq.s32.totalorder %s22, 0
      %p148 = por %p146, %p147
      %p149 = scmp.ne.s32.totalorder %s137, %s138
      %p150 = scmp.eq.s32.totalorder %s23, 1
      %p151 = por %p149, %p150
      %p153 = scmp.ne.s32.totalorder %s138, %s152
      %p154 = scmp.eq.s32.totalorder %s23, 0
      %p155 = por %p153, %p154
      %s157 = sadd.s32 %s156, 1
      %p160 = scmp.eq.s32.totalorder %s17, 1
      %p161 = scmp.ne.s32.totalorder %s156, %s158
      %p162 = scmp.eq.s32.totalorder %s17, 0
      %p163 = por %p161, %p162
      %p164 = scmp.ne.s32.totalorder %s156, %s158
      %p165 = scmp.eq.s32.totalorder %s22, 1
      %p166 = por %p164, %p165
      %p167 = scmp.ne.s32.totalorder %s158, %s159
      %p168 = scmp.eq.s32.totalorder %s22, 0
      %p169 = por %p167, %p168
      %p170 = scmp.ne.s32.totalorder %s158, %s159
      %p171 = scmp.eq.s32.totalorder %s23, 1
      %p172 = por %p170, %p171
      %p174 = scmp.ne.s32.totalorder %s159, %s173
      %p175 = scmp.eq.s32.totalorder %s23, 0
      %p176 = por %p174, %p175
      %s177 = ssub.s32 %s17, %s24
      %p178 = scmp.eq.s32.totalorder %s177, 0
      %s180 = sadd.s32 %s179, 1
      %s181 = scalar_select %p178, %s179, %s180
      %p184 = pneg %p178
      %p185 = scmp.eq.s32.totalorder %s17, 1
      %p186 = por %p184, %p185
      %p187 = scmp.ne.s32.totalorder %s179, %s182
      %p188 = scmp.eq.s32.totalorder %s17, 0
      %p189 = por %p187, %p188
      %p190 = scmp.ne.s32.totalorder %s179, %s182
      %p191 = scmp.eq.s32.totalorder %s22, 1
      %p192 = por %p190, %p191
      %p193 = scmp.ne.s32.totalorder %s182, %s183
      %p194 = scmp.eq.s32.totalorder %s22, 0
      %p195 = por %p193, %p194
      %p196 = scmp.ne.s32.totalorder %s182, %s183
      %p197 = scmp.eq.s32.totalorder %s23, 1
      %p198 = por %p196, %p197
      %p200 = scmp.ne.s32.totalorder %s183, %s199
      %p201 = scmp.eq.s32.totalorder %s23, 0
      %p202 = por %p200, %p201
      %p203 = scmp.le.s32.totalorder 1, %s17
      %p204 = scmp.lt.s32.totalorder %s17, 3
      %p205 = pnand %p203, %p204
      %p206 = pneg %p205
      // Predicated region
      $region9: #{tpu_custom_call.1} parent=5 // pred_check
        _
      $region10: #{tpu_custom_call.1} parent=5 // pred_check_branch
        %208 = sbr.rel (%p205) target = $region12
      $region11: #{tpu_custom_call.1} parent=5 // pred_region
        %s209 = ssub.s32 %s17, 1
        // Predicated region
        $region13: #{tpu_custom_call.1} parent=11 // pred_check
          %p210 = pneg %p64
        $region14: #{tpu_custom_call.1} parent=11 // pred_check_branch
          %212 = sbr.rel (%p210) target = $region16
        $region15: #{tpu_custom_call.1} parent=11 // pred_region
          _
        $region16: #{tpu_custom_call.1} parent=11 // pred_fallthru
          _
        // Predicated region
        $region17: #{tpu_custom_call.1} parent=11 // pred_check
          %p213 = pneg %p85
        $region18: #{tpu_custom_call.1} parent=11 // pred_check_branch
          %215 = sbr.rel (%p213) target = $region20
        $region19: #{tpu_custom_call.1} parent=11 // pred_region
          _
        $region20: #{tpu_custom_call.1} parent=11 // pred_fallthru
          _
        // Predicated region
        $region21: #{tpu_custom_call.1} parent=11 // pred_check
          %p216 = pneg %p106
        $region22: #{tpu_custom_call.1} parent=11 // pred_check_branch
          %218 = sbr.rel (%p216) target = $region24
        $region23: #{tpu_custom_call.1} parent=11 // pred_region
          _
        $region24: #{tpu_custom_call.1} parent=11 // pred_fallthru
          _
        // Predicated region
        $region25: #{tpu_custom_call.1} parent=11 // pred_check
          %p219 = pneg %p127
        $region26: #{tpu_custom_call.1} parent=11 // pred_check_branch
          %221 = sbr.rel (%p219) target = $region28
        $region27: #{tpu_custom_call.1} parent=11 // pred_region
          _
        $region28: #{tpu_custom_call.1} parent=11 // pred_fallthru
          _
        // Predicated region
        $region29: #{tpu_custom_call.1} parent=11 // pred_check
          %p222 = pneg %p148
        $region30: #{tpu_custom_call.1} parent=11 // pred_check_branch
          %224 = sbr.rel (%p222) target = $region32
        $region31: #{tpu_custom_call.1} parent=11 // pred_region
          _
        $region32: #{tpu_custom_call.1} parent=11 // pred_fallthru
          _
        // Predicated region
        $region33: #{tpu_custom_call.1} parent=11 // pred_check
          %p225 = pneg %p169
        $region34: #{tpu_custom_call.1} parent=11 // pred_check_branch
          %227 = sbr.rel (%p225) target = $region36
        $region35: #{tpu_custom_call.1} parent=11 // pred_region
          _
        $region36: #{tpu_custom_call.1} parent=11 // pred_fallthru
          _
      $region12: #{tpu_custom_call.1} parent=5 // pred_fallthru
        _
      %p228 = scmp.lt.s32.totalorder %s17, 2
      // Predicated region
      $region37: #{tpu_custom_call.1} parent=5 // pred_check
        %p229 = pneg %p228
      $region38: #{tpu_custom_call.1} parent=5 // pred_check_branch
        %231 = sbr.rel (%p229) target = $region40
      $region39: #{tpu_custom_call.1} parent=5 // pred_region
        // Predicated region
        $region41: #{tpu_custom_call.1} parent=39 // pred_check
          %p232 = pneg %p37
        $region42: #{tpu_custom_call.1} parent=39 // pred_check_branch
          %234 = sbr.rel (%p232) target = $region44
        $region43: #{tpu_custom_call.1} parent=39 // pred_region
          %p235 = scmp.lt.s32.totalorder %s17, 1
          %s236 = scalar_select %p235, %s17, 1
          %s237 = scalar_lea.vmem %s0, %s236
        $region44: #{tpu_custom_call.1} parent=39 // pred_fallthru
          _
      $region40: #{tpu_custom_call.1} parent=5 // pred_fallthru
        _
      %p238 = scmp.le.s32.totalorder 1, %s17
      %p239 = scmp.lt.s32.totalorder %s17, 3
      %p240 = pnand %p238, %p239
      %p241 = pneg %p240
      // Predicated region
      $region45: #{tpu_custom_call.1} parent=5 // pred_check
        _
      $region46: #{tpu_custom_call.1} parent=5 // pred_check_branch
        %243 = sbr.rel (%p240) target = $region48
      $region47: #{tpu_custom_call.1} parent=5 // pred_region
        %s244 = ssub.s32 %s17, 1
        %p245 = scmp.lt.s32.totalorder %s22, 1
        %s246 = scalar_select %p245, %s22, 1
        %s247 = scalar_lea.vmem %s0, %s246
        %p248 = pneg %p43
        %p249 = pneg %p40
        %p250 = pneg %p64
        %p251 = pneg %p61
        %p252 = pneg %p85
        %p253 = pneg %p82
        %p254 = pneg %p106
        %p255 = pneg %p103
        %p256 = pneg %p127
        %p257 = pneg %p124
        %p258 = pneg %p148
        %p259 = pneg %p145
        %p260 = pneg %p169
        %p261 = pneg %p166
        %p262 = pneg %p195
        %p263 = pneg %p192
        %s264 = sand.u32 %s182, 1
        %s265 = scalar_lea.sflag [#allocation4], %s264
        %s266 = sand.u32 %s182, 1
        %s267 = scalar_lea.vmem [#allocation3], %s266
        %p268 = scmp.lt.s32.totalorder %s22, 1
        %s269 = scalar_select %p268, %s22, 1
        %s270 = scalar_lea.vmem %s0, %s269
        %v272 = vld [vmem:[%s270] sm:$0x1]
        %v273 = vld [vmem:[%s1] sm:$0xff]
        %v274 = vld [vmem:[%s1 + $0x8] sm:$0xff]
        %v275 = vld [vmem:[%s1 + $0x10] sm:$0xff]
        %v276 = vld [vmem:[%s1 + $0x18] sm:$0xff]
        %278 = vset.pattern.permute.xlu0 0
        %279 = vperm.xlu0 %278, %v273
        %v280 = vpop.permute.xlu0 %279
        %283 = vset.pattern.permute.xlu0 0
        %284 = vperm.xlu0 %283, %v274
        %v285 = vpop.permute.xlu0 %284
        %288 = vset.pattern.permute.xlu0 0
        %289 = vperm.xlu0 %288, %v275
        %v290 = vpop.permute.xlu0 %289
        %293 = vset.pattern.permute.xlu0 0
        %294 = vperm.xlu0 %293, %v276
        %v295 = vpop.permute.xlu0 %294
        %v298 = vlaneseq
        %v299 = vshrl.u32 %v298, 7
        %v300 = vsub.s32 0, %v299
        %v301 = vrot.slane %v272, %v300
        %v303 = vmul.f32 %v280, %v301
        %v304 = vmul.f32 %v285, %v301
        %v305 = vmul.f32 %v290, %v301
        %v306 = vmul.f32 %v295, %v301
        %v307 = vld [vmem:[%s2] sm:$0xff]
        %v308 = vld [vmem:[%s2 + $0x8] sm:$0xff]
        %v309 = vld [vmem:[%s2 + $0x10] sm:$0xff]
        %v310 = vld [vmem:[%s2 + $0x18] sm:$0xff]
        %312 = vset.pattern.permute.xlu0 0
        %313 = vperm.xlu0 %312, %v307
        %v314 = vpop.permute.xlu0 %313
        %317 = vset.pattern.permute.xlu0 0
        %318 = vperm.xlu0 %317, %v308
        %v319 = vpop.permute.xlu0 %318
        %322 = vset.pattern.permute.xlu0 0
        %323 = vperm.xlu0 %322, %v309
        %v324 = vpop.permute.xlu0 %323
        %327 = vset.pattern.permute.xlu0 0
        %328 = vperm.xlu0 %327, %v310
        %v329 = vpop.permute.xlu0 %328
        %v331 = vadd.f32 %v303, %v314
        %v332 = vadd.f32 %v304, %v319
        %v333 = vadd.f32 %v305, %v324
        %v334 = vadd.f32 %v306, %v329
        %v335 = vtanh.pop %v331
        %v336 = vtanh.pop %v332
        %v337 = vtanh.pop %v333
        %v338 = vtanh.pop %v334
        %v339 = vld [vmem:[%s3] sm:$0xf]
        %v340 = vld [vmem:[%s3 + $0x4] sm:$0xf]
        %v341 = vld [vmem:[%s3 + $0x8] sm:$0xf]
        %v342 = vld [vmem:[%s3 + $0xc] sm:$0xf]
        %v343 = vpack.c.bf16 %v336, %v335
        %v344 = vpack.c.bf16 %v338, %v337
        %v345 = vld [vmem:[%s4] sm:$0xff]
        %v346 = vld [vmem:[%s4 + $0x8] sm:$0xff]
        %v347 = vld [vmem:[%s4 + $0x10] sm:$0xff]
        %v348 = vld [vmem:[%s4 + $0x18] sm:$0xff]
        %350 = vset.pattern.permute.xlu0 0
        %351 = vperm.xlu0 %350, %v345
        %v352 = vpop.permute.xlu0 %351
        %355 = vset.pattern.permute.xlu0 0
        %356 = vperm.xlu0 %355, %v346
        %v357 = vpop.permute.xlu0 %356
        %360 = vset.pattern.permute.xlu0 0
        %361 = vperm.xlu0 %360, %v347
        %v362 = vpop.permute.xlu0 %361
        %365 = vset.pattern.permute.xlu0 0
        %366 = vperm.xlu0 %365, %v348
        %v367 = vpop.permute.xlu0 %366
        %v373 = vunpack.c.l.b16 %v339
        %v374 = vunpack.c.l.b16 %v340
        %v375 = vunpack.c.l.b16 %v341
        %v376 = vunpack.c.l.b16 %v342
        %v377 = vpack.c.b16 %v374, %v373
        %v378 = vpack.c.b16 %v376, %v375
        %vm379 = vcmask 261120
        %v381 = vsel %vm379, %v377, 0
        %v384 = vsel %vm379, %v378, 0
        %386 = vmatprep.subr.bf16.mxu0 0
        %387 = vmatpush1.bf16.msra.mxu0 %v343
        %388 = vmatprep.subr.bf16.mxu0 0
        %389 = vmatpush1.bf16.msra.mxu0 %v344
        %390 = vmatprep.subr.bf16.mxu0 0
        %391 = vmatpush1.bf16.msra.mxu0 0
        %392 = vmatprep.subr.bf16.mxu0 0
        %393 = vmatpush1.bf16.msra.mxu0 0
        %394 = vmatprep.subr.bf16.mxu0 0
        %395 = vmatpush1.bf16.msra.mxu0 0
        %396 = vmatprep.subr.bf16.mxu0 0
        %397 = vmatpush1.bf16.msra.mxu0 0
        %398 = vmatprep.subr.bf16.mxu0 0
        %399 = vmatpush1.bf16.msra.mxu0 0
        %400 = vmatprep.subr.bf16.mxu0 0
        %401 = vmatpush1.bf16.msra.mxu0 0
        %402 = vmatprep.subr.bf16.mxu0 0
        %403 = vmatpush1.bf16.msra.mxu0 0
        %404 = vmatprep.subr.bf16.mxu0 0
        %405 = vmatpush1.bf16.msra.mxu0 0
        %406 = vmatprep.subr.bf16.mxu0 0
        %407 = vmatpush1.bf16.msra.mxu0 0
        %408 = vmatprep.subr.bf16.mxu0 0
        %409 = vmatpush1.bf16.msra.mxu0 0
        %410 = vmatprep.subr.bf16.mxu0 0
        %411 = vmatpush1.bf16.msra.mxu0 0
        %412 = vmatprep.subr.bf16.mxu0 0
        %413 = vmatpush1.bf16.msra.mxu0 0
        %414 = vmatprep.subr.bf16.mxu0 0
        %415 = vmatpush1.bf16.msra.mxu0 0
        %416 = vmatprep.subr.bf16.mxu0 0
        %417 = vmatpush1.bf16.msra.mxu0 0
        %418 = vmatprep.mubr.bf16.mxu0 0
        %419 = vmatmul.mubr.bf16.gmra.mrb[0].mxu0 %v381
        %v420 = vpop.f32.mrb[0].mxu0
        %v421 = vadd.f32 %v352, %v420
        %v422 = vpop.f32.mrb[0].mxu0
        %v423 = vpop.f32.mrb[0].mxu0
        %v424 = vadd.f32 %v357, %v423
        %v425 = vpop.f32.mrb[0].mxu0
        %426 = vmatprep.mubr.bf16.mxu0 0
        %427 = vmatmul.mubr.bf16.gmra.mrb[0].mxu0 %v384
        %v428 = vpop.f32.mrb[0].mxu0
        %v429 = vadd.f32 %v362, %v428
        %v430 = vpop.f32.mrb[0].mxu0
        %v431 = vpop.f32.mrb[0].mxu0
        %v432 = vadd.f32 %v367, %v431
        %v433 = vpop.f32.mrb[0].mxu0
        %434 = vdwg.mxu0
        %v435 = vtanh.pop %v421
        %v436 = vtanh.pop %v424
        %v437 = vtanh.pop %v429
        %v438 = vtanh.pop %v432
        %v439 = vld [vmem:[%s5] sm:$0xff]
        %v440 = vld [vmem:[%s5 + $0x8] sm:$0xff]
        %v441 = vld [vmem:[%s5 + $0x10] sm:$0xff]
        %v442 = vld [vmem:[%s5 + $0x18] sm:$0xff]
        %444 = vset.pattern.permute.xlu0 0
        %445 = vperm.xlu0 %444, %v439
        %v446 = vpop.permute.xlu0 %445
        %449 = vset.pattern.permute.xlu0 0
        %450 = vperm.xlu0 %449, %v440
        %v451 = vpop.permute.xlu0 %450
        %454 = vset.pattern.permute.xlu0 0
        %455 = vperm.xlu0 %454, %v441
        %v456 = vpop.permute.xlu0 %455
        %459 = vset.pattern.permute.xlu0 0
        %460 = vperm.xlu0 %459, %v442
        %v461 = vpop.permute.xlu0 %460
        %v463 = vmul.f32 %v446, %v435
        %v464 = vmul.f32 %v451, %v436
        %v465 = vmul.f32 %v456, %v437
        %v466 = vmul.f32 %v461, %v438
        %v467 = vadd.f32 %v463, %v464
        %v468 = vadd.f32 %v467, %v465
        %v469 = vadd.f32 %v468, %v466
        %v470 = vrot.slane %v469, 4
        %v471 = vadd.f32 %v469, %v470
        %v472 = vrot.slane %v471, 2
        %v473 = vadd.f32 %v471, %v472
        %v474 = vrot.slane %v473, 1
        %v475 = vadd.f32 %v473, %v474
        %s476 = sld [smem:[#allocation2]]
        %v477 = vstv %s476
        %v478 = vadd.f32 %v475, %v477
        %479 = vst [vmem:[%s267] sm:$0x1] %v478
        %s480 = sand.u32 %s182, 1
        %s481 = scalar_lea.sflag [#allocation4], %s480
        %s482 = sand.u32 %s182, 1
        %s483 = scalar_lea.vmem [#allocation3], %s482
        // Predicated region
        $region49: #{tpu_custom_call.1} parent=47 // pred_check
          %p484 = pneg %p192
        $region50: #{tpu_custom_call.1} parent=47 // pred_check_branch
          %486 = sbr.rel (%p484) target = $region52
        $region51: #{tpu_custom_call.1} parent=47 // pred_region
          %s488 = ssub.s32 16, 16
          %489 = vsyncadd %s481, %s488
          %s490 = smul.addr %s22, 16
          %s491 = scalar_lea.hbm %s7, %s490
          %s493 = sshll.u32 %s483, 4
          %s494 = int_to_ptr.vmem [resolvable:$true] %s493
          %496 = dma.vmem_to_hbm [thread:$0]  %s494, 16, %s491, %s481
        $region52: #{tpu_custom_call.1} parent=47 // pred_fallthru
          _
      $region48: #{tpu_custom_call.1} parent=5 // pred_fallthru
        _
      %p497 = scmp.le.s32.totalorder 2, %s17
      // Predicated region
      $region53: #{tpu_custom_call.1} parent=5 // pred_check
        %p498 = pneg %p497
      $region54: #{tpu_custom_call.1} parent=5 // pred_check_branch
        %500 = sbr.rel (%p498) target = $region56
      $region55: #{tpu_custom_call.1} parent=5 // pred_region
        %s501 = ssub.s32 %s17, 2
        // Predicated region
        $region57: #{tpu_custom_call.1} parent=55 // pred_check
          %p502 = pneg %p198
        $region58: #{tpu_custom_call.1} parent=55 // pred_check_branch
          %504 = sbr.rel (%p502) target = $region60
        $region59: #{tpu_custom_call.1} parent=55 // pred_region
          %s505 = sand.u32 %s183, 1
          %s506 = scalar_lea.sflag [#allocation4], %s505
          %s507 = sand.u32 %s183, 1
          %s508 = scalar_lea.vmem [#allocation3], %s507
          %509 = dma.done %s506, 16
        $region60: #{tpu_custom_call.1} parent=55 // pred_fallthru
          _
      $region56: #{tpu_custom_call.1} parent=5 // pred_fallthru
        _
    $region6: #{tpu_custom_call.1} parent=1 // loop_footer
      %s21 = sadd.s32 1, %s17
    $region7: #{tpu_custom_call.1} parent=1 // loop_footer_branch
      %16 = sbr.rel target = $region3
    $region8: #{tpu_custom_call.1} parent=1 // loop_exit
      _
    %510 = vsyncpa [#allocation4], 1
    %s511 = scalar_lea.sflag [#allocation4], 1
    %512 = vsyncpa %s511, 1

// kernel: tpu_custom_call.1
$region0: #{tpu_custom_call.1}
  #allocation0 [shape = 'u32[]', space=smem, size = 0x4, offset = 0x4, fixed_abs, tag = 'smem constant byte address 0x4 - core index']
  #allocation1 [shape = 'u32[144,128]{1,0:T(1,128)}', space=vmem, size = 0x12000, scoped, tag = 'internal scratch']
  #allocation2 [shape = 'f32[1]{0:T(128)S(6)}', space=smem, size = 0x200, scoped, tag = 'scoped memory for tpu_custom_call.1']
  %s0 = inlined_call_operand.vmem [shape: f32[1,256], index: 0, kind: input, shape index: {}]
  %s1 = inlined_call_operand.vmem [shape: f32[32,1], index: 1, kind: input, shape index: {}]
  %s2 = inlined_call_operand.vmem [shape: f32[32,1], index: 2, kind: input, shape index: {}]
  %s3 = inlined_call_operand.vmem [shape: bf16[1,32,32], index: 3, kind: input, shape index: {}]
  %s4 = inlined_call_operand.vmem [shape: f32[1,32,1], index: 4, kind: input, shape index: {}]
  %s5 = inlined_call_operand.vmem [shape: f32[32,1], index: 5, kind: input, shape index: {}]
  %s6 = inlined_call_operand.<no memory space> [shape: f32[1], index: 6, kind: input, shape index: {}]
  %s7 = inlined_call_operand.hbm [shape: f32[1,256], index: 7, kind: output, shape index: {}]
  %s8 = sld [smem:[#allocation0]]
  $region61: #{tpu_custom_call.1} parent=0
    _
  %s10 = ssub.s32 1, %s8
  %s11 = scalar_select 0, %s10, %s8
  %12 = sst [smem:[#allocation2]] %s6
  $region1: #{tpu_custom_call.1} parent=0
    #allocation3 [shape = 'u8[1024]{0}', space=vmem, size = 0x400, scoped, tag = 'output window, operand 0']
    #allocation4 [shape = 's32[2]{0}', space=sflag, size = 0x8, scoped, tag = 'scoped memory for tpu_custom_call.1']
    %13 = vsyncpa [#allocation4], 0
    %s14 = scalar_lea.sflag [#allocation4], 1
    %15 = vsyncpa %s14, 0
    loop: start=0, step=1, limit=4
    $region2: #{tpu_custom_call.1} parent=1 // loop_pre_header
      _
    $region3: #{tpu_custom_call.1} parent=1 // loop_header
      %s17 = sphi 0, %s21
      %p18 = scmp.ge.s32.totalorder %s17, 4
      %s27 = sphi 0, %s29
      %s30 = sphi 0, %s27
      %s31 = sphi 0, %s30
      %s47 = sphi 0, %s31
      %s51 = sphi 0, %s51
      %s53 = sphi 0, %s51
      %s54 = sphi 0, %s53
      %s68 = sphi 0, %s54
      %s72 = sphi 0, %s72
      %s74 = sphi 0, %s72
      %s75 = sphi 0, %s74
      %s89 = sphi 0, %s75
      %s93 = sphi 0, %s93
      %s95 = sphi 0, %s93
      %s96 = sphi 0, %s95
      %s110 = sphi 0, %s96
      %s114 = sphi 0, %s114
      %s116 = sphi 0, %s114
      %s117 = sphi 0, %s116
      %s131 = sphi 0, %s117
      %s135 = sphi 0, %s135
      %s137 = sphi 0, %s135
      %s138 = sphi 0, %s137
      %s152 = sphi 0, %s138
      %s156 = sphi 0, %s156
      %s158 = sphi 0, %s156
      %s159 = sphi 0, %s158
      %s173 = sphi 0, %s159
      %s179 = sphi 0, %s181
      %s182 = sphi 0, %s179
      %s183 = sphi 0, %s182
      %s199 = sphi 0, %s183
    $region4: #{tpu_custom_call.1} parent=1 // loop_header_branch
      %20 = sbr.rel (%p18) target = $region8
    $region5: #{tpu_custom_call.1} parent=1 // loop_body
      %s22 = ssub.s32 %s17, 1
      %s23 = ssub.s32 %s17, 2
      %s24 = sadd.s32 %s17, 1
      %s25 = ssub.s32 %s17, %s24
      %p26 = scmp.eq.s32.totalorder %s25, 0
      %s28 = sadd.s32 %s27, 1
      %s29 = scalar_select %p26, %s27, %s28
      %p32 = pneg %p26
      %p33 = scmp.eq.s32.totalorder %s17, 1
      %p34 = por %p32, %p33
      %p35 = scmp.ne.s32.totalorder %s27, %s30
      %p36 = scmp.eq.s32.totalorder %s17, 0
      %p37 = por %p35, %p36
      %p38 = scmp.ne.s32.totalorder %s27, %s30
      %p39 = scmp.eq.s32.totalorder %s22, 1
      %p40 = por %p38, %p39
      %p41 = scmp.ne.s32.totalorder %s30, %s31
      %p42 = scmp.eq.s32.totalorder %s22, 0
      %p43 = por %p41, %p42
      %p44 = scmp.ne.s32.totalorder %s30, %s31
      %p45 = scmp.eq.s32.totalorder %s23, 1
      %p46 = por %p44, %p45
      %p48 = scmp.ne.s32.totalorder %s31, %s47
      %p49 = scmp.eq.s32.totalorder %s23, 0
      %p50 = por %p48, %p49
      %s52 = sadd.s32 %s51, 1
      %p55 = scmp.eq.s32.totalorder %s17, 1
      %p56 = scmp.ne.s32.totalorder %s51, %s53
      %p57 = scmp.eq.s32.totalorder %s17, 0
      %p58 = por %p56, %p57
      %p59 = scmp.ne.s32.totalorder %s51, %s53
      %p60 = scmp.eq.s32.totalorder %s22, 1
      %p61 = por %p59, %p60
      %p62 = scmp.ne.s32.totalorder %s53, %s54
      %p63 = scmp.eq.s32.totalorder %s22, 0
      %p64 = por %p62, %p63
      %p65 = scmp.ne.s32.totalorder %s53, %s54
      %p66 = scmp.eq.s32.totalorder %s23, 1
      %p67 = por %p65, %p66
      %p69 = scmp.ne.s32.totalorder %s54, %s68
      %p70 = scmp.eq.s32.totalorder %s23, 0
      %p71 = por %p69, %p70
      %s73 = sadd.s32 %s72, 1
      %p76 = scmp.eq.s32.totalorder %s17, 1
      %p77 = scmp.ne.s32.totalorder %s72, %s74
      %p78 = scmp.eq.s32.totalorder %s17, 0
      %p79 = por %p77, %p78
      %p80 = scmp.ne.s32.totalorder %s72, %s74
      %p81 = scmp.eq.s32.totalorder %s22, 1
      %p82 = por %p80, %p81
      %p83 = scmp.ne.s32.totalorder %s74, %s75
      %p84 = scmp.eq.s32.totalorder %s22, 0
      %p85 = por %p83, %p84
      %p86 = scmp.ne.s32.totalorder %s74, %s75
      %p87 = scmp.eq.s32.totalorder %s23, 1
      %p88 = por %p86, %p87
      %p90 = scmp.ne.s32.totalorder %s75, %s89
      %p91 = scmp.eq.s32.totalorder %s23, 0
      %p92 = por %p90, %p91
      %s94 = sadd.s32 %s93, 1
      %p97 = scmp.eq.s32.totalorder %s17, 1
      %p98 = scmp.ne.s32.totalorder %s93, %s95
      %p99 = scmp.eq.s32.totalorder %s17, 0
      %p100 = por %p98, %p99
      %p101 = scmp.ne.s32.totalorder %s93, %s95
      %p102 = scmp.eq.s32.totalorder %s22, 1
      %p103 = por %p101, %p102
      %p104 = scmp.ne.s32.totalorder %s95, %s96
      %p105 = scmp.eq.s32.totalorder %s22, 0
      %p106 = por %p104, %p105
      %p107 = scmp.ne.s32.totalorder %s95, %s96
      %p108 = scmp.eq.s32.totalorder %s23, 1
      %p109 = por %p107, %p108
      %p111 = scmp.ne.s32.totalorder %s96, %s110
      %p112 = scmp.eq.s32.totalorder %s23, 0
      %p113 = por %p111, %p112
      %s115 = sadd.s32 %s114, 1
      %p118 = scmp.eq.s32.totalorder %s17, 1
      %p119 = scmp.ne.s32.totalorder %s114, %s116
      %p120 = scmp.eq.s32.totalorder %s17, 0
      %p121 = por %p119, %p120
      %p122 = scmp.ne.s32.totalorder %s114, %s116
      %p123 = scmp.eq.s32.totalorder %s22, 1
      %p124 = por %p122, %p123
      %p125 = scmp.ne.s32.totalorder %s116, %s117
      %p126 = scmp.eq.s32.totalorder %s22, 0
      %p127 = por %p125, %p126
      %p128 = scmp.ne.s32.totalorder %s116, %s117
      %p129 = scmp.eq.s32.totalorder %s23, 1
      %p130 = por %p128, %p129
      %p132 = scmp.ne.s32.totalorder %s117, %s131
      %p133 = scmp.eq.s32.totalorder %s23, 0
      %p134 = por %p132, %p133
      %s136 = sadd.s32 %s135, 1
      %p139 = scmp.eq.s32.totalorder %s17, 1
      %p140 = scmp.ne.s32.totalorder %s135, %s137
      %p141 = scmp.eq.s32.totalorder %s17, 0
      %p142 = por %p140, %p141
      %p143 = scmp.ne.s32.totalorder %s135, %s137
      %p144 = scmp.eq.s32.totalorder %s22, 1
      %p145 = por %p143, %p144
      %p146 = scmp.ne.s32.totalorder %s137, %s138
      %p147 = scmp.eq.s32.totalorder %s22, 0
      %p148 = por %p146, %p147
      %p149 = scmp.ne.s32.totalorder %s137, %s138
      %p150 = scmp.eq.s32.totalorder %s23, 1
      %p151 = por %p149, %p150
      %p153 = scmp.ne.s32.totalorder %s138, %s152
      %p154 = scmp.eq.s32.totalorder %s23, 0
      %p155 = por %p153, %p154
      %s157 = sadd.s32 %s156, 1
      %p160 = scmp.eq.s32.totalorder %s17, 1
      %p161 = scmp.ne.s32.totalorder %s156, %s158
      %p162 = scmp.eq.s32.totalorder %s17, 0
      %p163 = por %p161, %p162
      %p164 = scmp.ne.s32.totalorder %s156, %s158
      %p165 = scmp.eq.s32.totalorder %s22, 1
      %p166 = por %p164, %p165
      %p167 = scmp.ne.s32.totalorder %s158, %s159
      %p168 = scmp.eq.s32.totalorder %s22, 0
      %p169 = por %p167, %p168
      %p170 = scmp.ne.s32.totalorder %s158, %s159
      %p171 = scmp.eq.s32.totalorder %s23, 1
      %p172 = por %p170, %p171
      %p174 = scmp.ne.s32.totalorder %s159, %s173
      %p175 = scmp.eq.s32.totalorder %s23, 0
      %p176 = por %p174, %p175
      %s177 = ssub.s32 %s17, %s24
      %p178 = scmp.eq.s32.totalorder %s177, 0
      %s180 = sadd.s32 %s179, 1
      %s181 = scalar_select %p178, %s179, %s180
      %p184 = pneg %p178
      %p185 = scmp.eq.s32.totalorder %s17, 1
      %p186 = por %p184, %p185
      %p187 = scmp.ne.s32.totalorder %s179, %s182
      %p188 = scmp.eq.s32.totalorder %s17, 0
      %p189 = por %p187, %p188
      %p190 = scmp.ne.s32.totalorder %s179, %s182
      %p191 = scmp.eq.s32.totalorder %s22, 1
      %p192 = por %p190, %p191
      %p193 = scmp.ne.s32.totalorder %s182, %s183
      %p194 = scmp.eq.s32.totalorder %s22, 0
      %p195 = por %p193, %p194
      %p196 = scmp.ne.s32.totalorder %s182, %s183
      %p197 = scmp.eq.s32.totalorder %s23, 1
      %p198 = por %p196, %p197
      %p200 = scmp.ne.s32.totalorder %s183, %s199
      %p201 = scmp.eq.s32.totalorder %s23, 0
      %p202 = por %p200, %p201
      %p203 = scmp.le.s32.totalorder 1, %s17
      %p204 = scmp.lt.s32.totalorder %s17, 3
      %p205 = pnand %p203, %p204
      %p206 = pneg %p205
      // Predicated region
      $region9: #{tpu_custom_call.1} parent=5 // pred_check
        _
      $region10: #{tpu_custom_call.1} parent=5 // pred_check_branch
        %208 = sbr.rel (%p205) target = $region12
      $region11: #{tpu_custom_call.1} parent=5 // pred_region
        %s209 = ssub.s32 %s17, 1
        // Predicated region
        $region13: #{tpu_custom_call.1} parent=11 // pred_check
          %p210 = pneg %p64
        $region14: #{tpu_custom_call.1} parent=11 // pred_check_branch
          %212 = sbr.rel (%p210) target = $region16
        $region15: #{tpu_custom_call.1} parent=11 // pred_region
          _
        $region16: #{tpu_custom_call.1} parent=11 // pred_fallthru
          _
        // Predicated region
        $region17: #{tpu_custom_call.1} parent=11 // pred_check
          %p213 = pneg %p85
        $region18: #{tpu_custom_call.1} parent=11 // pred_check_branch
          %215 = sbr.rel (%p213) target = $region20
        $region19: #{tpu_custom_call.1} parent=11 // pred_region
          _
        $region20: #{tpu_custom_call.1} parent=11 // pred_fallthru
          _
        // Predicated region
        $region21: #{tpu_custom_call.1} parent=11 // pred_check
          %p216 = pneg %p106
        $region22: #{tpu_custom_call.1} parent=11 // pred_check_branch
          %218 = sbr.rel (%p216) target = $region24
        $region23: #{tpu_custom_call.1} parent=11 // pred_region
          _
        $region24: #{tpu_custom_call.1} parent=11 // pred_fallthru
          _
        // Predicated region
        $region25: #{tpu_custom_call.1} parent=11 // pred_check
          %p219 = pneg %p127
        $region26: #{tpu_custom_call.1} parent=11 // pred_check_branch
          %221 = sbr.rel (%p219) target = $region28
        $region27: #{tpu_custom_call.1} parent=11 // pred_region
          _
        $region28: #{tpu_custom_call.1} parent=11 // pred_fallthru
          _
        // Predicated region
        $region29: #{tpu_custom_call.1} parent=11 // pred_check
          %p222 = pneg %p148
        $region30: #{tpu_custom_call.1} parent=11 // pred_check_branch
          %224 = sbr.rel (%p222) target = $region32
        $region31: #{tpu_custom_call.1} parent=11 // pred_region
          _
        $region32: #{tpu_custom_call.1} parent=11 // pred_fallthru
          _
        // Predicated region
        $region33: #{tpu_custom_call.1} parent=11 // pred_check
          %p225 = pneg %p169
        $region34: #{tpu_custom_call.1} parent=11 // pred_check_branch
          %227 = sbr.rel (%p225) target = $region36
        $region35: #{tpu_custom_call.1} parent=11 // pred_region
          _
        $region36: #{tpu_custom_call.1} parent=11 // pred_fallthru
          _
      $region12: #{tpu_custom_call.1} parent=5 // pred_fallthru
        _
      %p228 = scmp.lt.s32.totalorder %s17, 2
      // Predicated region
      $region37: #{tpu_custom_call.1} parent=5 // pred_check
        %p229 = pneg %p228
      $region38: #{tpu_custom_call.1} parent=5 // pred_check_branch
        %231 = sbr.rel (%p229) target = $region40
      $region39: #{tpu_custom_call.1} parent=5 // pred_region
        // Predicated region
        $region41: #{tpu_custom_call.1} parent=39 // pred_check
          %p232 = pneg %p37
        $region42: #{tpu_custom_call.1} parent=39 // pred_check_branch
          %234 = sbr.rel (%p232) target = $region44
        $region43: #{tpu_custom_call.1} parent=39 // pred_region
          %p235 = scmp.lt.s32.totalorder %s17, 1
          %s236 = scalar_select %p235, %s17, 1
          %s237 = scalar_lea.vmem %s0, %s236
        $region44: #{tpu_custom_call.1} parent=39 // pred_fallthru
          _
      $region40: #{tpu_custom_call.1} parent=5 // pred_fallthru
        _
      %p238 = scmp.le.s32.totalorder 1, %s17
      %p239 = scmp.lt.s32.totalorder %s17, 3
      %p240 = pnand %p238, %p239
      %p241 = pneg %p240
      // Predicated region
      $region45: #{tpu_custom_call.1} parent=5 // pred_check
        _
      $region46: #{tpu_custom_call.1} parent=5 // pred_check_branch
        %243 = sbr.rel (%p240) target = $region48
      $region47: #{tpu_custom_call.1} parent=5 // pred_region
        %s244 = ssub.s32 %s17, 1
        %p245 = scmp.lt.s32.totalorder %s22, 1
        %s246 = scalar_select %p245, %s22, 1
        %s247 = scalar_lea.vmem %s0, %s246
        %p248 = pneg %p43
        %p249 = pneg %p40
        %p250 = pneg %p64
        %p251 = pneg %p61
        %p252 = pneg %p85
        %p253 = pneg %p82
        %p254 = pneg %p106
        %p255 = pneg %p103
        %p256 = pneg %p127
        %p257 = pneg %p124
        %p258 = pneg %p148
        %p259 = pneg %p145
        %p260 = pneg %p169
        %p261 = pneg %p166
        %p262 = pneg %p195
        %p263 = pneg %p192
        %s264 = sand.u32 %s182, 1
        %s265 = scalar_lea.sflag [#allocation4], %s264
        %s266 = sand.u32 %s182, 1
        %s267 = scalar_lea.vmem [#allocation3], %s266
        %p268 = scmp.lt.s32.totalorder %s22, 1
        %s269 = scalar_select %p268, %s22, 1
        %s270 = scalar_lea.vmem %s0, %s269
        %v272 = vld [vmem:[%s270] sm:$0x1]
        %v273 = vld [vmem:[%s1] sm:$0xff]
        %v274 = vld [vmem:[%s1 + $0x8] sm:$0xff]
        %v275 = vld [vmem:[%s1 + $0x10] sm:$0xff]
        %v276 = vld [vmem:[%s1 + $0x18] sm:$0xff]
        %278 = vset.pattern.permute.xlu0 0
        %279 = vperm.xlu0 %278, %v273
        %v280 = vpop.permute.xlu0 %279
        %283 = vset.pattern.permute.xlu0 0
        %284 = vperm.xlu0 %283, %v274
        %v285 = vpop.permute.xlu0 %284
        %288 = vset.pattern.permute.xlu0 0
        %289 = vperm.xlu0 %288, %v275
        %v290 = vpop.permute.xlu0 %289
        %293 = vset.pattern.permute.xlu0 0
        %294 = vperm.xlu0 %293, %v276
        %v295 = vpop.permute.xlu0 %294
        %v298 = vlaneseq
        %v299 = vshrl.u32 %v298, 7
        %v300 = vsub.s32 0, %v299
        %v301 = vrot.slane %v272, %v300
        %v303 = vmul.f32 %v280, %v301
        %v304 = vmul.f32 %v285, %v301
        %v305 = vmul.f32 %v290, %v301
        %v306 = vmul.f32 %v295, %v301
        %v307 = vld [vmem:[%s2] sm:$0xff]
        %v308 = vld [vmem:[%s2 + $0x8] sm:$0xff]
        %v309 = vld [vmem:[%s2 + $0x10] sm:$0xff]
        %v310 = vld [vmem:[%s2 + $0x18] sm:$0xff]
        %312 = vset.pattern.permute.xlu0 0
        %313 = vperm.xlu0 %312, %v307
        %v314 = vpop.permute.xlu0 %313
        %317 = vset.pattern.permute.xlu0 0
        %318 = vperm.xlu0 %317, %v308
        %v319 = vpop.permute.xlu0 %318
        %322 = vset.pattern.permute.xlu0 0
        %323 = vperm.xlu0 %322, %v309
        %v324 = vpop.permute.xlu0 %323
        %327 = vset.pattern.permute.xlu0 0
        %328 = vperm.xlu0 %327, %v310
        %v329 = vpop.permute.xlu0 %328
        %v331 = vadd.f32 %v303, %v314
        %v332 = vadd.f32 %v304, %v319
        %v333 = vadd.f32 %v305, %v324
        %v334 = vadd.f32 %v306, %v329
        %v335 = vtanh.pop %v331
        %v336 = vtanh.pop %v332
        %v337 = vtanh.pop %v333
        %v338 = vtanh.pop %v334
        %v339 = vld [vmem:[%s3] sm:$0xf]
        %v340 = vld [vmem:[%s3 + $0x4] sm:$0xf]
        %v341 = vld [vmem:[%s3 + $0x8] sm:$0xf]
        %v342 = vld [vmem:[%s3 + $0xc] sm:$0xf]
        %v343 = vpack.c.bf16 %v336, %v335
        %v344 = vpack.c.bf16 %v338, %v337
        %v345 = vld [vmem:[%s4] sm:$0xff]
        %v346 = vld [vmem:[%s4 + $0x8] sm:$0xff]
        %v347 = vld [vmem:[%s4 + $0x10] sm:$0xff]
        %v348 = vld [vmem:[%s4 + $0x18] sm:$0xff]
        %350 = vset.pattern.permute.xlu0 0
        %351 = vperm.xlu0 %350, %v345
        %v352 = vpop.permute.xlu0 %351
        %355 = vset.pattern.permute.xlu0 0
        %356 = vperm.xlu0 %355, %v346
        %v357 = vpop.permute.xlu0 %356
        %360 = vset.pattern.permute.xlu0 0
        %361 = vperm.xlu0 %360, %v347
        %v362 = vpop.permute.xlu0 %361
        %365 = vset.pattern.permute.xlu0 0
        %366 = vperm.xlu0 %365, %v348
        %v367 = vpop.permute.xlu0 %366
        %v373 = vunpack.c.l.b16 %v339
        %v374 = vunpack.c.l.b16 %v340
        %v375 = vunpack.c.l.b16 %v341
        %v376 = vunpack.c.l.b16 %v342
        %v377 = vpack.c.b16 %v374, %v373
        %v378 = vpack.c.b16 %v376, %v375
        %vm379 = vcmask 261120
        %v381 = vsel %vm379, %v377, 0
        %v384 = vsel %vm379, %v378, 0
        %386 = vmatprep.subr.bf16.mxu0 0
        %387 = vmatpush1.bf16.msra.mxu0 %v343
        %388 = vmatprep.subr.bf16.mxu0 0
        %389 = vmatpush1.bf16.msra.mxu0 %v344
        %390 = vmatprep.subr.bf16.mxu0 0
        %391 = vmatpush1.bf16.msra.mxu0 0
        %392 = vmatprep.subr.bf16.mxu0 0
        %393 = vmatpush1.bf16.msra.mxu0 0
        %394 = vmatprep.subr.bf16.mxu0 0
        %395 = vmatpush1.bf16.msra.mxu0 0
        %396 = vmatprep.subr.bf16.mxu0 0
        %397 = vmatpush1.bf16.msra.mxu0 0
        %398 = vmatprep.subr.bf16.mxu0 0
        %399 = vmatpush1.bf16.msra.mxu0 0
        %400 = vmatprep.subr.bf16.mxu0 0
        %401 = vmatpush1.bf16.msra.mxu0 0
        %402 = vmatprep.subr.bf16.mxu0 0
        %403 = vmatpush1.bf16.msra.mxu0 0
        %404 = vmatprep.subr.bf16.mxu0 0
        %405 = vmatpush1.bf16.msra.mxu0 0
        %406 = vmatprep.subr.bf16.mxu0 0
        %407 = vmatpush1.bf16.msra.mxu0 0
        %408 = vmatprep.subr.bf16.mxu0 0
        %409 = vmatpush1.bf16.msra.mxu0 0
        %410 = vmatprep.subr.bf16.mxu0 0
        %411 = vmatpush1.bf16.msra.mxu0 0
        %412 = vmatprep.subr.bf16.mxu0 0
        %413 = vmatpush1.bf16.msra.mxu0 0
        %414 = vmatprep.subr.bf16.mxu0 0
        %415 = vmatpush1.bf16.msra.mxu0 0
        %416 = vmatprep.subr.bf16.mxu0 0
        %417 = vmatpush1.bf16.msra.mxu0 0
        %418 = vmatprep.mubr.bf16.mxu0 0
        %419 = vmatmul.mubr.bf16.gmra.mrb[0].mxu0 %v381
        %v420 = vpop.f32.mrb[0].mxu0
        %v421 = vadd.f32 %v352, %v420
        %v422 = vpop.f32.mrb[0].mxu0
        %v423 = vpop.f32.mrb[0].mxu0
        %v424 = vadd.f32 %v357, %v423
        %v425 = vpop.f32.mrb[0].mxu0
        %426 = vmatprep.mubr.bf16.mxu0 0
        %427 = vmatmul.mubr.bf16.gmra.mrb[0].mxu0 %v384
        %v428 = vpop.f32.mrb[0].mxu0
        %v429 = vadd.f32 %v362, %v428
        %v430 = vpop.f32.mrb[0].mxu0
        %v431 = vpop.f32.mrb[0].mxu0
        %v432 = vadd.f32 %v367, %v431
        %v433 = vpop.f32.mrb[0].mxu0
        %434 = vdwg.mxu0
        %v435 = vtanh.pop %v421
        %v436 = vtanh.pop %v424
        %v437 = vtanh.pop %v429
        %v438 = vtanh.pop %v432
        %v439 = vld [vmem:[%s5] sm:$0xff]
        %v440 = vld [vmem:[%s5 + $0x8] sm:$0xff]
        %v441 = vld [vmem:[%s5 + $0x10] sm:$0xff]
        %v442 = vld [vmem:[%s5 + $0x18] sm:$0xff]
        %444 = vset.pattern.permute.xlu0 0
        %445 = vperm.xlu0 %444, %v439
        %v446 = vpop.permute.xlu0 %445
        %449 = vset.pattern.permute.xlu0 0
        %450 = vperm.xlu0 %449, %v440
        %v451 = vpop.permute.xlu0 %450
        %454 = vset.pattern.permute.xlu0 0
        %455 = vperm.xlu0 %454, %v441
        %v456 = vpop.permute.xlu0 %455
        %459 = vset.pattern.permute.xlu0 0
        %460 = vperm.xlu0 %459, %v442
        %v461 = vpop.permute.xlu0 %460
        %v463 = vmul.f32 %v446, %v435
        %v464 = vmul.f32 %v451, %v436
        %v465 = vmul.f32 %v456, %v437
        %v466 = vmul.f32 %v461, %v438
        %v467 = vadd.f32 %v463, %v464
        %v468 = vadd.f32 %v467, %v465
        %v469 = vadd.f32 %v468, %v466
        %v470 = vrot.slane %v469, 4
        %v471 = vadd.f32 %v469, %v470
        %v472 = vrot.slane %v471, 2
        %v473 = vadd.f32 %v471, %v472
        %v474 = vrot.slane %v473, 1
        %v475 = vadd.f32 %v473, %v474
        %s476 = sld [smem:[#allocation2]]
        %v477 = vstv %s476
        %v478 = vadd.f32 %v475, %v477
        %479 = vst [vmem:[%s267] sm:$0x1] %v478
        %s480 = sand.u32 %s182, 1
        %s481 = scalar_lea.sflag [#allocation4], %s480
        %s482 = sand.u32 %s182, 1
        %s483 = scalar_lea.vmem [#allocation3], %s482
        // Predicated region
        $region49: #{tpu_custom_call.1} parent=47 // pred_check
          %p484 = pneg %p192
        $region50: #{tpu_custom_call.1} parent=47 // pred_check_branch
          %486 = sbr.rel (%p484) target = $region52
        $region51: #{tpu_custom_call.1} parent=47 // pred_region
          %s488 = ssub.s32 16, 16
          %489 = vsyncadd %s481, %s488
          %s490 = smul.addr %s22, 16
          %s491 = scalar_lea.hbm %s7, %s490
          %s493 = sshll.u32 %s483, 4
          %s494 = int_to_ptr.vmem [resolvable:$true] %s493
          %496 = dma.vmem_to_hbm [thread:$0]  %s494, 16, %s491, %s481
        $region52: #{tpu_custom_call.1} parent=47 // pred_fallthru
          _
      $region48: #{tpu_custom_call.1} parent=5 // pred_fallthru
        _
      %p497 = scmp.le.s32.totalorder 2, %s17
      // Predicated region
      $region53: #{tpu_custom_call.1} parent=5 // pred_check
        %p498 = pneg %p497
      $region54: #{tpu_custom_call.1} parent=5 // pred_check_branch
        %500 = sbr.rel (%p498) target = $region56
      $region55: #{tpu_custom_call.1} parent=5 // pred_region
        %s501 = ssub.s32 %s17, 2
        // Predicated region
        $region57: #{tpu_custom_call.1} parent=55 // pred_check
          %p502 = pneg %p198
        $region58: #{tpu_custom_call.1} parent=55 // pred_check_branch
          %504 = sbr.rel (%p502) target = $region60
        $region59: #{tpu_custom_call.1} parent=55 // pred_region
          %s505 = sand.u32 %s183, 1
          %s506 = scalar_lea.sflag [#allocation4], %s505
          %s507 = sand.u32 %s183, 1
          %s508 = scalar_lea.vmem [#allocation3], %s507
          %509 = dma.done %s506, 16
        $region60: #{tpu_custom_call.1} parent=55 // pred_fallthru
          _
      $region56: #{tpu_custom_call.1} parent=5 // pred_fallthru
        _
    $region6: #{tpu_custom_call.1} parent=1 // loop_footer
      %s21 = sadd.s32 1, %s17
    $region7: #{tpu_custom_call.1} parent=1 // loop_footer_branch
      %16 = sbr.rel target = $region3
    $region8: #{tpu_custom_call.1} parent=1 // loop_exit
      _
    %510 = vsyncpa [#allocation4], 1
    %s511 = scalar_lea.sflag [#allocation4], 1
    %512 = vsyncpa %s511, 1

</llo_original>
